<compile_context>
chip_gen: v5e
topology: v5e:2x2
jax: 0.10.0
libtpu: 0.0.40
codegen_flags: <defaults>
</compile_context>

<pallas_src>
import jax
import jax.numpy as jnp
from jax.experimental import pallas as pl
from jax.experimental.pallas import tpu as pltpu


def _l2_normalize(x, eps):
    n = jnp.sqrt(jnp.sum(x * x, axis=-1, keepdims=True))
    return x / jnp.maximum(n, eps)


def _select_and_loss_kernel(user_ref, w1_ref, b1_ref, w2_ref, b2_ref,
                            cand_ref, tgt_ref, idx_ref, loss_ref):
    # ---- MLP: Linear -> ReLU -> Linear (f32 accumulation on the MXU) ----
    h = jnp.dot(user_ref[...], w1_ref[...], preferred_element_type=jnp.float32)
    h = jnp.maximum(h + b1_ref[...], 0.0)                                   # (B, H)
    u = jnp.dot(h, w2_ref[...], preferred_element_type=jnp.float32)
    u = u + b2_ref[...]                                                     # (B, E)

    # ---- cosine similarity: transformed user vs candidates (F.normalize) ----
    cand = cand_ref[...]                                                    # (B, C, E)
    u_n = _l2_normalize(u, 1e-12)                                           # (B, E)
    c_n = _l2_normalize(cand, 1e-12)                                        # (B, C, E)
    sim = jnp.sum(c_n * u_n[:, None, :], axis=-1)                           # (B, C)

    # ---- argmax over candidates (first max on ties) ----
    B, C = sim.shape
    col = jax.lax.broadcasted_iota(jnp.int32, (B, C), 1)
    smax = jnp.max(sim, axis=-1, keepdims=True)                             # (B, 1)
    idx = jnp.min(jnp.where(sim >= smax, col, C), axis=-1, keepdims=True)   # (B, 1)
    idx_ref[...] = idx.astype(jnp.int32)

    # ---- gather the selected (unnormalized) embedding via one-hot reduce ----
    one_hot = (col == idx).astype(jnp.float32)                              # (B, C)
    selected = jnp.sum(cand * one_hot[:, :, None], axis=1)                  # (B, E)

    # ---- CosineSimilarity(dim=1, eps=1e-6) against the target, then loss ----
    tgt = tgt_ref[...]                                                      # (1, E)
    eps = 1e-6
    sel_norm = jnp.maximum(
        jnp.sqrt(jnp.sum(selected * selected, axis=-1, keepdims=True)), eps)
    tgt_norm = jnp.maximum(
        jnp.sqrt(jnp.sum(tgt * tgt, axis=-1, keepdims=True)), eps)
    cos_sim = (jnp.sum(selected * tgt, axis=-1, keepdims=True)
               / (sel_norm * tgt_norm))                                     # (B, 1)

    loss_ref[...] = 1.0 - jnp.sum(cos_sim, axis=0, keepdims=True) / B       # (1, 1)


def select_and_loss(user_embedding, w1, b1, w2, b2, cand_emb, target_emb):
    """Pallas implementation of SelectAndLoss.forward (embeddings precomputed).

    Returns (selected_idx (B,), loss scalar). selected_idx stands in for
    selected_text: it indexes each user's candidate list.
    """
    B = user_embedding.shape[0]
    vmem = pl.BlockSpec(memory_space=pltpu.MemorySpace.VMEM)

    idx, loss = pl.pallas_call(
        _select_and_loss_kernel,
        out_shape=(jax.ShapeDtypeStruct((B, 1), jnp.int32),
                   jax.ShapeDtypeStruct((1, 1), jnp.float32)),
        in_specs=[vmem] * 7,
        out_specs=(vmem, vmem),
    )(user_embedding, w1, b1.reshape(1, -1), w2, b2.reshape(1, -1),
      cand_emb, target_emb.reshape(1, -1))
    return idx[:, 0], loss[0, 0]


def select_and_loss_ref(user_embedding, w1, b1, w2, b2, cand_emb, target_emb):
    """Pure-JAX reference mirroring the PyTorch module."""
    h = jnp.maximum(user_embedding @ w1 + b1, 0.0)
    u = h @ w2 + b2
    u_n = u / jnp.maximum(jnp.linalg.norm(u, axis=-1, keepdims=True), 1e-12)
    c_n = cand_emb / jnp.maximum(
        jnp.linalg.norm(cand_emb, axis=-1, keepdims=True), 1e-12)
    sim = jnp.sum(c_n * u_n[:, None, :], axis=-1)
    idx = jnp.argmax(sim, axis=-1)
    selected = jnp.take_along_axis(cand_emb, idx[:, None, None], axis=1)[:, 0, :]
    eps = 1e-6
    sel_norm = jnp.maximum(jnp.linalg.norm(selected, axis=-1), eps)
    tgt_norm = jnp.maximum(jnp.linalg.norm(target_emb), eps)
    cos = (selected @ target_emb) / (sel_norm * tgt_norm)
    return idx, 1.0 - jnp.mean(cos)


if __name__ == "__main__":
    # Small shapes consistent with the module: mpnet emsize E = 768 is forced
    # (cosine sim between MLP output and candidate embeddings), B users,
    # C candidates per user.
    B, C, E = 4, 8, 768
    input_dim, hidden_dim = 768, 64       # MLP(input_dim, hidden_dim, output_dim=E)

    key = jax.random.PRNGKey(0)
    k_u, k_w1, k_b1, k_w2, k_b2, k_c, k_t = jax.random.split(key, 7)

    # user embedding (nn.Embedding init range ±0.1) and MLP (nn.Linear-style) params
    user_embedding = jax.random.uniform(k_u, (B, input_dim), jnp.float32, -0.1, 0.1)
    bnd1 = 1.0 / (input_dim ** 0.5)
    w1 = jax.random.uniform(k_w1, (input_dim, hidden_dim), jnp.float32, -bnd1, bnd1)
    b1 = jax.random.uniform(k_b1, (hidden_dim,), jnp.float32, -bnd1, bnd1)
    bnd2 = 1.0 / (hidden_dim ** 0.5)
    w2 = jax.random.uniform(k_w2, (hidden_dim, E), jnp.float32, -bnd2, bnd2)
    b2 = jax.random.uniform(k_b2, (E,), jnp.float32, -bnd2, bnd2)

    # TODO(synk): the frozen SentenceTransformer('all-mpnet-base-v2') text
    # encoder has no Pallas equivalent; its outputs are modeled as precomputed
    # candidate/target embedding arrays.
    cand_emb = jax.random.normal(k_c, (B, C, E), jnp.float32)
    target_emb = jax.random.normal(k_t, (E,), jnp.float32)

    idx, loss = select_and_loss(user_embedding, w1, b1, w2, b2, cand_emb, target_emb)
    idx, loss = jax.block_until_ready((idx, loss))

    idx_ref, loss_ref = select_and_loss_ref(
        user_embedding, w1, b1, w2, b2, cand_emb, target_emb)
    assert idx.shape == (B,) and loss.shape == ()
    assert jnp.array_equal(idx, idx_ref.astype(jnp.int32)), "selection mismatch vs reference"
    assert jnp.allclose(loss, loss_ref, atol=1e-4, rtol=1e-4), "loss mismatch vs reference"

    print("KERNEL_OK")
</pallas_src>

<mosaic_0001>
module attributes {stable_mosaic.version = 11 : i64} {
  func.func @_select_and_loss_kernel(%arg0: memref<4x768xf32, #tpu.memory_space<vmem>>, %arg1: memref<768x64xf32, #tpu.memory_space<vmem>>, %arg2: memref<1x64xf32, #tpu.memory_space<vmem>>, %arg3: memref<64x768xf32, #tpu.memory_space<vmem>>, %arg4: memref<1x768xf32, #tpu.memory_space<vmem>>, %arg5: memref<4x8x768xf32, #tpu.memory_space<vmem>>, %arg6: memref<1x768xf32, #tpu.memory_space<vmem>>, %arg7: memref<4x1xi32, #tpu.memory_space<vmem>>, %arg8: memref<1x1xf32, #tpu.memory_space<vmem>>) attributes {dimension_semantics = [], scalar_prefetch = 0 : i64, scratch_operands = 0 : i64, tpu.core_type = #tpu.core_type<tc>} {
    %c0 = arith.constant 0 : index
    %c0_0 = arith.constant 0 : index
    %0 = vector.load %arg0[%c0, %c0_0] : memref<4x768xf32, #tpu.memory_space<vmem>>, vector<4x768xf32>
    %c0_1 = arith.constant 0 : index
    %c0_2 = arith.constant 0 : index
    %1 = vector.load %arg1[%c0_1, %c0_2] : memref<768x64xf32, #tpu.memory_space<vmem>>, vector<768x64xf32>
    %cst = arith.constant dense<0.000000e+00> : vector<4x64xf32>
    %2 = tpu.matmul %0, %1, %cst {dimension_numbers = #tpu.dot_dimension_numbers<[1], [0], [0], [1], [0, 0, 1, 1], [], []>} : vector<4x768xf32>, vector<768x64xf32>, vector<4x64xf32> -> vector<4x64xf32>
    %c0_3 = arith.constant 0 : index
    %c0_4 = arith.constant 0 : index
    %3 = vector.load %arg2[%c0_3, %c0_4] : memref<1x64xf32, #tpu.memory_space<vmem>>, vector<1x64xf32>
    %4 = vector.broadcast %3 : vector<1x64xf32> to vector<4x64xf32>
    %5 = arith.addf %2, %4 : vector<4x64xf32>
    %cst_5 = arith.constant 0.000000e+00 : f32
    %6 = vector.broadcast %cst_5 : f32 to vector<4x64xf32>
    %7 = arith.maximumf %5, %6 : vector<4x64xf32>
    %c0_6 = arith.constant 0 : index
    %c0_7 = arith.constant 0 : index
    %8 = vector.load %arg3[%c0_6, %c0_7] : memref<64x768xf32, #tpu.memory_space<vmem>>, vector<64x768xf32>
    %cst_8 = arith.constant dense<0.000000e+00> : vector<4x768xf32>
    %9 = tpu.matmul %7, %8, %cst_8 {dimension_numbers = #tpu.dot_dimension_numbers<[1], [0], [0], [1], [0, 0, 1, 1], [], []>} : vector<4x64xf32>, vector<64x768xf32>, vector<4x768xf32> -> vector<4x768xf32>
    %c0_9 = arith.constant 0 : index
    %c0_10 = arith.constant 0 : index
    %10 = vector.load %arg4[%c0_9, %c0_10] : memref<1x768xf32, #tpu.memory_space<vmem>>, vector<1x768xf32>
    %11 = vector.broadcast %10 : vector<1x768xf32> to vector<4x768xf32>
    %12 = arith.addf %9, %11 : vector<4x768xf32>
    %c0_11 = arith.constant 0 : index
    %c0_12 = arith.constant 0 : index
    %c0_13 = arith.constant 0 : index
    %13 = vector.load %arg5[%c0_11, %c0_12, %c0_13] : memref<4x8x768xf32, #tpu.memory_space<vmem>>, vector<4x8x768xf32>
    %14 = arith.mulf %12, %12 : vector<4x768xf32>
    %cst_14 = arith.constant dense<0.000000e+00> : vector<4xf32>
    %15 = vector.multi_reduction <add>, %14, %cst_14 [1] : vector<4x768xf32> to vector<4xf32>
    %16 = vector.shape_cast %15 : vector<4xf32> to vector<4x1xf32>
    %17 = math.sqrt %16 : vector<4x1xf32>
    %cst_15 = arith.constant 9.99999996E-13 : f32
    %18 = vector.broadcast %cst_15 : f32 to vector<4x1xf32>
    %19 = arith.maximumf %17, %18 : vector<4x1xf32>
    %20 = vector.broadcast %19 : vector<4x1xf32> to vector<4x768xf32>
    %21 = arith.divf %12, %20 : vector<4x768xf32>
    %22 = arith.mulf %13, %13 : vector<4x8x768xf32>
    %cst_16 = arith.constant dense<0.000000e+00> : vector<4x8xf32>
    %23 = vector.multi_reduction <add>, %22, %cst_16 [2] : vector<4x8x768xf32> to vector<4x8xf32>
    %24 = vector.shape_cast %23 : vector<4x8xf32> to vector<4x8x1xf32>
    %25 = math.sqrt %24 : vector<4x8x1xf32>
    %cst_17 = arith.constant 9.99999996E-13 : f32
    %26 = vector.broadcast %cst_17 : f32 to vector<4x8x1xf32>
    %27 = arith.maximumf %25, %26 : vector<4x8x1xf32>
    %28 = vector.broadcast %27 : vector<4x8x1xf32> to vector<4x8x768xf32>
    %29 = arith.divf %13, %28 : vector<4x8x768xf32>
    %30 = vector.shape_cast %21 : vector<4x768xf32> to vector<4x1x768xf32>
    %31 = vector.broadcast %30 : vector<4x1x768xf32> to vector<4x8x768xf32>
    %32 = arith.mulf %29, %31 : vector<4x8x768xf32>
    %cst_18 = arith.constant dense<0.000000e+00> : vector<4x8xf32>
    %33 = vector.multi_reduction <add>, %32, %cst_18 [2] : vector<4x8x768xf32> to vector<4x8xf32>
    %34 = tpu.iota {dimensions = array<i32: 1>} : vector<4x8xi32>
    %cst_19 = arith.constant dense<0xFF800000> : vector<4xf32>
    %35 = vector.multi_reduction <maximumf>, %33, %cst_19 [1] : vector<4x8xf32> to vector<4xf32>
    %36 = vector.shape_cast %35 : vector<4xf32> to vector<4x1xf32>
    %37 = vector.broadcast %36 : vector<4x1xf32> to vector<4x8xf32>
    %38 = arith.cmpf oge, %33, %37 : vector<4x8xf32>
    %c8_i32 = arith.constant 8 : i32
    %39 = vector.broadcast %c8_i32 : i32 to vector<4x8xi32>
    %40 = arith.select %38, %34, %39 : vector<4x8xi1>, vector<4x8xi32>
    %cst_20 = arith.constant dense<2147483647> : vector<4xi32>
    %41 = vector.multi_reduction <minsi>, %40, %cst_20 [1] : vector<4x8xi32> to vector<4xi32>
    %42 = vector.shape_cast %41 : vector<4xi32> to vector<4x1xi32>
    %c0_21 = arith.constant 0 : index
    %c0_22 = arith.constant 0 : index
    %43 = vector.load %arg7[%c0_21, %c0_22] : memref<4x1xi32, #tpu.memory_space<vmem>>, vector<4x1xi32>
    tpu.vector_store %arg7[%c0_21, %c0_22], %42 {strides = array<i32>} : memref<4x1xi32, #tpu.memory_space<vmem>>, vector<4x1xi32>,
    %44 = vector.broadcast %42 : vector<4x1xi32> to vector<4x8xi32>
    %45 = arith.cmpi eq, %34, %44 : vector<4x8xi32>
    %46 = arith.extui %45 : vector<4x8xi1> to vector<4x8xi32>
    %47 = arith.sitofp %46 : vector<4x8xi32> to vector<4x8xf32>
    %48 = vector.shape_cast %47 : vector<4x8xf32> to vector<4x8x1xf32>
    %49 = vector.broadcast %48 : vector<4x8x1xf32> to vector<4x8x768xf32>
    %50 = arith.mulf %13, %49 : vector<4x8x768xf32>
    %cst_23 = arith.constant dense<0.000000e+00> : vector<4x768xf32>
    %51 = vector.multi_reduction <add>, %50, %cst_23 [1] : vector<4x8x768xf32> to vector<4x768xf32>
    %c0_24 = arith.constant 0 : index
    %c0_25 = arith.constant 0 : index
    %52 = vector.load %arg6[%c0_24, %c0_25] : memref<1x768xf32, #tpu.memory_space<vmem>>, vector<1x768xf32>
    %53 = arith.mulf %51, %51 : vector<4x768xf32>
    %cst_26 = arith.constant dense<0.000000e+00> : vector<4xf32>
    %54 = vector.multi_reduction <add>, %53, %cst_26 [1] : vector<4x768xf32> to vector<4xf32>
    %55 = vector.shape_cast %54 : vector<4xf32> to vector<4x1xf32>
    %56 = math.sqrt %55 : vector<4x1xf32>
    %cst_27 = arith.constant 9.99999997E-7 : f32
    %57 = vector.broadcast %cst_27 : f32 to vector<4x1xf32>
    %58 = arith.maximumf %56, %57 : vector<4x1xf32>
    %59 = arith.mulf %52, %52 : vector<1x768xf32>
    %cst_28 = arith.constant dense<0.000000e+00> : vector<1xf32>
    %60 = vector.multi_reduction <add>, %59, %cst_28 [1] : vector<1x768xf32> to vector<1xf32>
    %61 = vector.shape_cast %60 : vector<1xf32> to vector<1x1xf32>
    %62 = math.sqrt %61 : vector<1x1xf32>
    %cst_29 = arith.constant 9.99999997E-7 : f32
    %63 = vector.broadcast %cst_29 : f32 to vector<1x1xf32>
    %64 = arith.maximumf %62, %63 : vector<1x1xf32>
    %65 = vector.broadcast %52 : vector<1x768xf32> to vector<4x768xf32>
    %66 = arith.mulf %51, %65 : vector<4x768xf32>
    %cst_30 = arith.constant dense<0.000000e+00> : vector<4xf32>
    %67 = vector.multi_reduction <add>, %66, %cst_30 [1] : vector<4x768xf32> to vector<4xf32>
    %68 = vector.shape_cast %67 : vector<4xf32> to vector<4x1xf32>
    %69 = vector.broadcast %64 : vector<1x1xf32> to vector<4x1xf32>
    %70 = arith.mulf %58, %69 : vector<4x1xf32>
    %71 = arith.divf %68, %70 : vector<4x1xf32>
    %cst_31 = arith.constant dense<0.000000e+00> : vector<1xf32>
    %72 = vector.multi_reduction <add>, %71, %cst_31 [0] : vector<4x1xf32> to vector<1xf32>
    %73 = vector.shape_cast %72 : vector<1xf32> to vector<1x1xf32>
    %cst_32 = arith.constant 4.000000e+00 : f32
    %74 = vector.broadcast %cst_32 : f32 to vector<1x1xf32>
    %75 = arith.divf %73, %74 : vector<1x1xf32>
    %cst_33 = arith.constant 1.000000e+00 : f32
    %76 = vector.broadcast %cst_33 : f32 to vector<1x1xf32>
    %77 = arith.subf %76, %75 : vector<1x1xf32>
    %c0_34 = arith.constant 0 : index
    %c0_35 = arith.constant 0 : index
    %78 = vector.load %arg8[%c0_34, %c0_35] : memref<1x1xf32, #tpu.memory_space<vmem>>, vector<1x1xf32>
    tpu.vector_store %arg8[%c0_34, %c0_35], %77 {strides = array<i32>} : memref<1x1xf32, #tpu.memory_space<vmem>>, vector<1x1xf32>,
    return
  }
}

</mosaic_0001>

<llo_original>
// kernel: tpu_custom_call.1
$region0: #{tpu_custom_call.1}
  #allocation0 [shape = 'u32[]', space=smem, size = 0x4, offset = 0x4, fixed_abs, tag = 'smem constant byte address 0x4 - core index']
  #allocation1 [shape = 'u32[72,128]{1,0:T(1,128)}', space=vmem, size = 0x9000, scoped, tag = 'internal scratch']
  %s0 = inlined_call_operand.vmem [shape: f32[4,768], index: 0, kind: input, shape index: {}]
  %s1 = inlined_call_operand.vmem [shape: f32[768,64], index: 1, kind: input, shape index: {}]
  %s2 = inlined_call_operand.vmem [shape: f32[1,64], index: 2, kind: input, shape index: {}]
  %s3 = inlined_call_operand.vmem [shape: f32[64,768], index: 3, kind: input, shape index: {}]
  %s4 = inlined_call_operand.vmem [shape: f32[1,768], index: 4, kind: input, shape index: {}]
  %s5 = inlined_call_operand.vmem [shape: f32[4,8,768], index: 5, kind: input, shape index: {}]
  %s6 = inlined_call_operand.vmem [shape: f32[1,768], index: 6, kind: input, shape index: {}]
  %s7 = inlined_call_operand.vmem [shape: s32[4,1], index: 7, kind: output, shape index: {0}]
  %s8 = inlined_call_operand.hbm [shape: f32[1,1], index: 8, kind: output, shape index: {1}]
  %9 = xla_tuple %s7, %s8
  %s10 = sld [smem:[#allocation0]]
  $region46: #{tpu_custom_call.1} parent=0
    _
  %s12 = ssub.s32 1, %s10
  %s13 = scalar_select 0, %s12, %s10
  $region1: #{tpu_custom_call.1} parent=0
    #allocation2 [shape = 'u8[512]{0}', space=vmem, size = 0x400, scoped, tag = 'output window, operand 1, single buffered']
    #allocation3 [shape = 's32[1]{0}', space=sflag, size = 0x4, scoped, tag = 'scoped memory for tpu_custom_call.1']
    %14 = vsyncpa [#allocation3], 0
    // Predicated region
    $region2: #{tpu_custom_call.1} parent=1 // pred_check
      _
    $region3: #{tpu_custom_call.1} parent=1 // pred_check_branch
      %16 = sbr.rel (0) target = $region5
    $region4: #{tpu_custom_call.1} parent=1 // pred_region
      _
    $region5: #{tpu_custom_call.1} parent=1 // pred_fallthru
      _
    // Predicated region
    $region6: #{tpu_custom_call.1} parent=1 // pred_check
      _
    $region7: #{tpu_custom_call.1} parent=1 // pred_check_branch
      %18 = sbr.rel (0) target = $region9
    $region8: #{tpu_custom_call.1} parent=1 // pred_region
      _
    $region9: #{tpu_custom_call.1} parent=1 // pred_fallthru
      _
    // Predicated region
    $region10: #{tpu_custom_call.1} parent=1 // pred_check
      _
    $region11: #{tpu_custom_call.1} parent=1 // pred_check_branch
      %20 = sbr.rel (0) target = $region13
    $region12: #{tpu_custom_call.1} parent=1 // pred_region
      _
    $region13: #{tpu_custom_call.1} parent=1 // pred_fallthru
      _
    // Predicated region
    $region14: #{tpu_custom_call.1} parent=1 // pred_check
      _
    $region15: #{tpu_custom_call.1} parent=1 // pred_check_branch
      %22 = sbr.rel (0) target = $region17
    $region16: #{tpu_custom_call.1} parent=1 // pred_region
      _
    $region17: #{tpu_custom_call.1} parent=1 // pred_fallthru
      _
    // Predicated region
    $region18: #{tpu_custom_call.1} parent=1 // pred_check
      _
    $region19: #{tpu_custom_call.1} parent=1 // pred_check_branch
      %24 = sbr.rel (0) target = $region21
    $region20: #{tpu_custom_call.1} parent=1 // pred_region
      _
    $region21: #{tpu_custom_call.1} parent=1 // pred_fallthru
      _
    // Predicated region
    $region22: #{tpu_custom_call.1} parent=1 // pred_check
      _
    $region23: #{tpu_custom_call.1} parent=1 // pred_check_branch
      %26 = sbr.rel (0) target = $region25
    $region24: #{tpu_custom_call.1} parent=1 // pred_region
      _
    $region25: #{tpu_custom_call.1} parent=1 // pred_fallthru
      _
    // Predicated region
    $region26: #{tpu_custom_call.1} parent=1 // pred_check
      _
    $region27: #{tpu_custom_call.1} parent=1 // pred_check_branch
      %28 = sbr.rel (0) target = $region29
    $region28: #{tpu_custom_call.1} parent=1 // pred_region
      _
    $region29: #{tpu_custom_call.1} parent=1 // pred_fallthru
      _
    %v29 = vld [vmem:[%s0] sm:$0xff]
    %v30 = vld [vmem:[%s0 + $0x8] sm:$0xff]
    %v31 = vld [vmem:[%s0 + $0x10] sm:$0xff]
    %v32 = vld [vmem:[%s1] sm:$0xff]
    %v33 = vld [vmem:[%s1 + $0x8] sm:$0xff]
    %v34 = vld [vmem:[%s1 + $0x10] sm:$0xff]
    %v35 = vld [vmem:[%s1 + $0x18] sm:$0xff]
    %v36 = vld [vmem:[%s1 + $0x20] sm:$0xff]
    %v37 = vld [vmem:[%s1 + $0x28] sm:$0xff]
    %v38 = vld [vmem:[%s1 + $0x30] sm:$0xff]
    %v39 = vld [vmem:[%s1 + $0x38] sm:$0xff]
    %v40 = vld [vmem:[%s1 + $0x40] sm:$0xff]
    %v41 = vld [vmem:[%s1 + $0x48] sm:$0xff]
    %v42 = vld [vmem:[%s1 + $0x50] sm:$0xff]
    %v43 = vld [vmem:[%s1 + $0x58] sm:$0xff]
    %v44 = vld [vmem:[%s1 + $0x60] sm:$0xff]
    %v45 = vld [vmem:[%s1 + $0x68] sm:$0xff]
    %v46 = vld [vmem:[%s1 + $0x70] sm:$0xff]
    %v47 = vld [vmem:[%s1 + $0x78] sm:$0xff]
    %v48 = vld [vmem:[%s1 + $0x80] sm:$0xff]
    %v49 = vld [vmem:[%s1 + $0x88] sm:$0xff]
    %v50 = vld [vmem:[%s1 + $0x90] sm:$0xff]
    %v51 = vld [vmem:[%s1 + $0x98] sm:$0xff]
    %v52 = vld [vmem:[%s1 + $0xa0] sm:$0xff]
    %v53 = vld [vmem:[%s1 + $0xa8] sm:$0xff]
    %v54 = vld [vmem:[%s1 + $0xb0] sm:$0xff]
    %v55 = vld [vmem:[%s1 + $0xb8] sm:$0xff]
    %v56 = vld [vmem:[%s1 + $0xc0] sm:$0xff]
    %v57 = vld [vmem:[%s1 + $0xc8] sm:$0xff]
    %v58 = vld [vmem:[%s1 + $0xd0] sm:$0xff]
    %v59 = vld [vmem:[%s1 + $0xd8] sm:$0xff]
    %v60 = vld [vmem:[%s1 + $0xe0] sm:$0xff]
    %v61 = vld [vmem:[%s1 + $0xe8] sm:$0xff]
    %v62 = vld [vmem:[%s1 + $0xf0] sm:$0xff]
    %v63 = vld [vmem:[%s1 + $0xf8] sm:$0xff]
    %v64 = vld [vmem:[%s1 + $0x100] sm:$0xff]
    %v65 = vld [vmem:[%s1 + $0x108] sm:$0xff]
    %v66 = vld [vmem:[%s1 + $0x110] sm:$0xff]
    %v67 = vld [vmem:[%s1 + $0x118] sm:$0xff]
    %v68 = vld [vmem:[%s1 + $0x120] sm:$0xff]
    %v69 = vld [vmem:[%s1 + $0x128] sm:$0xff]
    %v70 = vld [vmem:[%s1 + $0x130] sm:$0xff]
    %v71 = vld [vmem:[%s1 + $0x138] sm:$0xff]
    %v72 = vld [vmem:[%s1 + $0x140] sm:$0xff]
    %v73 = vld [vmem:[%s1 + $0x148] sm:$0xff]
    %v74 = vld [vmem:[%s1 + $0x150] sm:$0xff]
    %v75 = vld [vmem:[%s1 + $0x158] sm:$0xff]
    %v76 = vld [vmem:[%s1 + $0x160] sm:$0xff]
    %v77 = vld [vmem:[%s1 + $0x168] sm:$0xff]
    %v78 = vld [vmem:[%s1 + $0x170] sm:$0xff]
    %v79 = vld [vmem:[%s1 + $0x178] sm:$0xff]
    %v80 = vld [vmem:[%s1 + $0x180] sm:$0xff]
    %v81 = vld [vmem:[%s1 + $0x188] sm:$0xff]
    %v82 = vld [vmem:[%s1 + $0x190] sm:$0xff]
    %v83 = vld [vmem:[%s1 + $0x198] sm:$0xff]
    %v84 = vld [vmem:[%s1 + $0x1a0] sm:$0xff]
    %v85 = vld [vmem:[%s1 + $0x1a8] sm:$0xff]
    %v86 = vld [vmem:[%s1 + $0x1b0] sm:$0xff]
    %v87 = vld [vmem:[%s1 + $0x1b8] sm:$0xff]
    %v88 = vld [vmem:[%s1 + $0x1c0] sm:$0xff]
    %v89 = vld [vmem:[%s1 + $0x1c8] sm:$0xff]
    %v90 = vld [vmem:[%s1 + $0x1d0] sm:$0xff]
    %v91 = vld [vmem:[%s1 + $0x1d8] sm:$0xff]
    %v92 = vld [vmem:[%s1 + $0x1e0] sm:$0xff]
    %v93 = vld [vmem:[%s1 + $0x1e8] sm:$0xff]
    %v94 = vld [vmem:[%s1 + $0x1f0] sm:$0xff]
    %v95 = vld [vmem:[%s1 + $0x1f8] sm:$0xff]
    %v96 = vld [vmem:[%s1 + $0x200] sm:$0xff]
    %v97 = vld [vmem:[%s1 + $0x208] sm:$0xff]
    %v98 = vld [vmem:[%s1 + $0x210] sm:$0xff]
    %v99 = vld [vmem:[%s1 + $0x218] sm:$0xff]
    %v100 = vld [vmem:[%s1 + $0x220] sm:$0xff]
    %v101 = vld [vmem:[%s1 + $0x228] sm:$0xff]
    %v102 = vld [vmem:[%s1 + $0x230] sm:$0xff]
    %v103 = vld [vmem:[%s1 + $0x238] sm:$0xff]
    %v104 = vld [vmem:[%s1 + $0x240] sm:$0xff]
    %v105 = vld [vmem:[%s1 + $0x248] sm:$0xff]
    %v106 = vld [vmem:[%s1 + $0x250] sm:$0xff]
    %v107 = vld [vmem:[%s1 + $0x258] sm:$0xff]
    %v108 = vld [vmem:[%s1 + $0x260] sm:$0xff]
    %v109 = vld [vmem:[%s1 + $0x268] sm:$0xff]
    %v110 = vld [vmem:[%s1 + $0x270] sm:$0xff]
    %v111 = vld [vmem:[%s1 + $0x278] sm:$0xff]
    %v112 = vld [vmem:[%s1 + $0x280] sm:$0xff]
    %v113 = vld [vmem:[%s1 + $0x288] sm:$0xff]
    %v114 = vld [vmem:[%s1 + $0x290] sm:$0xff]
    %v115 = vld [vmem:[%s1 + $0x298] sm:$0xff]
    %v116 = vld [vmem:[%s1 + $0x2a0] sm:$0xff]
    %v117 = vld [vmem:[%s1 + $0x2a8] sm:$0xff]
    %v118 = vld [vmem:[%s1 + $0x2b0] sm:$0xff]
    %v119 = vld [vmem:[%s1 + $0x2b8] sm:$0xff]
    %v120 = vld [vmem:[%s1 + $0x2c0] sm:$0xff]
    %v121 = vld [vmem:[%s1 + $0x2c8] sm:$0xff]
    %v122 = vld [vmem:[%s1 + $0x2d0] sm:$0xff]
    %v123 = vld [vmem:[%s1 + $0x2d8] sm:$0xff]
    %v124 = vld [vmem:[%s1 + $0x2e0] sm:$0xff]
    %v125 = vld [vmem:[%s1 + $0x2e8] sm:$0xff]
    %v126 = vld [vmem:[%s1 + $0x2f0] sm:$0xff]
    %v127 = vld [vmem:[%s1 + $0x2f8] sm:$0xff]
    %v128 = vld [vmem:[%s2] sm:$0x1]
    %v130 = vperm.slane %v128, 0
    %135 = vst [vmem:[#allocation1] ss:$2 sm:$0xff] %v29
    %s136 = scalar_lea.vmem [#allocation1], 16
    %137 = vst [vmem:[%s136] ss:$2 sm:$0xff] %v30
    %s138 = scalar_lea.vmem [#allocation1], 32
    %139 = vst [vmem:[%s138] ss:$2 sm:$0xff] %v31
    %v140 = vld.sshfl [vmem:[#allocation1] sm:$0xff pattern:$0x75316420]
    %v141 = vld.sshfl [vmem:[#allocation1 + $0x8] sm:$0xff pattern:$0x75316420]
    %v142 = vld.sshfl [vmem:[#allocation1 + $0x10] sm:$0xff pattern:$0x75316420]
    %v143 = vld.sshfl [vmem:[#allocation1 + $0x18] sm:$0xff pattern:$0x75316420]
    %v144 = vld.sshfl [vmem:[#allocation1 + $0x20] sm:$0xff pattern:$0x75316420]
    %v145 = vld.sshfl [vmem:[#allocation1 + $0x28] sm:$0xff pattern:$0x75316420]
    %152 = vmatpush.msra.mxu0 %v47
    %153 = vmatpush.msra.mxu0 %v46
    %154 = vmatpush.msra.mxu0 %v45
    %155 = vmatpush.msra.mxu0 %v44
    %156 = vmatpush.msra.mxu0 %v43
    %157 = vmatpush.msra.mxu0 %v42
    %158 = vmatpush.msra.mxu0 %v41
    %159 = vmatpush.msra.mxu0 %v40
    %160 = vmatpush.msra.mxu0 %v39
    %161 = vmatpush.msra.mxu0 %v38
    %162 = vmatpush.msra.mxu0 %v37
    %163 = vmatpush.msra.mxu0 %v36
    %164 = vmatpush.msra.mxu0 %v35
    %165 = vmatpush.msra.mxu0 %v34
    %166 = vmatpush.msra.mxu0 %v33
    %167 = vmatpush.msra.mxu0 %v32
    %168 = vmatmul.f32.gmra.mxu0 %v140
    %v169 = vpop.f32.mrf.mxu0
    %v170 = vadd.f32 %v130, %v169
    %171 = vdwg.mxu0
    %172 = vmatpush.msra.mxu0 %v63
    %173 = vmatpush.msra.mxu0 %v62
    %174 = vmatpush.msra.mxu0 %v61
    %175 = vmatpush.msra.mxu0 %v60
    %176 = vmatpush.msra.mxu0 %v59
    %177 = vmatpush.msra.mxu0 %v58
    %178 = vmatpush.msra.mxu0 %v57
    %179 = vmatpush.msra.mxu0 %v56
    %180 = vmatpush.msra.mxu0 %v55
    %181 = vmatpush.msra.mxu0 %v54
    %182 = vmatpush.msra.mxu0 %v53
    %183 = vmatpush.msra.mxu0 %v52
    %184 = vmatpush.msra.mxu0 %v51
    %185 = vmatpush.msra.mxu0 %v50
    %186 = vmatpush.msra.mxu0 %v49
    %187 = vmatpush.msra.mxu0 %v48
    %188 = vmatmul.f32.gmra.mxu0 %v141
    %v189 = vpop.f32.mrf.mxu0
    %v190 = vadd.f32 %v170, %v189
    %191 = vdwg.mxu0
    %192 = vmatpush.msra.mxu0 %v79
    %193 = vmatpush.msra.mxu0 %v78
    %194 = vmatpush.msra.mxu0 %v77
    %195 = vmatpush.msra.mxu0 %v76
    %196 = vmatpush.msra.mxu0 %v75
    %197 = vmatpush.msra.mxu0 %v74
    %198 = vmatpush.msra.mxu0 %v73
    %199 = vmatpush.msra.mxu0 %v72
    %200 = vmatpush.msra.mxu0 %v71
    %201 = vmatpush.msra.mxu0 %v70
    %202 = vmatpush.msra.mxu0 %v69
    %203 = vmatpush.msra.mxu0 %v68
    %204 = vmatpush.msra.mxu0 %v67
    %205 = vmatpush.msra.mxu0 %v66
    %206 = vmatpush.msra.mxu0 %v65
    %207 = vmatpush.msra.mxu0 %v64
    %208 = vmatmul.f32.gmra.mxu0 %v142
    %v209 = vpop.f32.mrf.mxu0
    %v210 = vadd.f32 %v190, %v209
    %211 = vdwg.mxu0
    %212 = vmatpush.msra.mxu0 %v95
    %213 = vmatpush.msra.mxu0 %v94
    %214 = vmatpush.msra.mxu0 %v93
    %215 = vmatpush.msra.mxu0 %v92
    %216 = vmatpush.msra.mxu0 %v91
    %217 = vmatpush.msra.mxu0 %v90
    %218 = vmatpush.msra.mxu0 %v89
    %219 = vmatpush.msra.mxu0 %v88
    %220 = vmatpush.msra.mxu0 %v87
    %221 = vmatpush.msra.mxu0 %v86
    %222 = vmatpush.msra.mxu0 %v85
    %223 = vmatpush.msra.mxu0 %v84
    %224 = vmatpush.msra.mxu0 %v83
    %225 = vmatpush.msra.mxu0 %v82
    %226 = vmatpush.msra.mxu0 %v81
    %227 = vmatpush.msra.mxu0 %v80
    %228 = vmatmul.f32.gmra.mxu0 %v143
    %v229 = vpop.f32.mrf.mxu0
    %v230 = vadd.f32 %v210, %v229
    %231 = vdwg.mxu0
    %232 = vmatpush.msra.mxu0 %v111
    %233 = vmatpush.msra.mxu0 %v110
    %234 = vmatpush.msra.mxu0 %v109
    %235 = vmatpush.msra.mxu0 %v108
    %236 = vmatpush.msra.mxu0 %v107
    %237 = vmatpush.msra.mxu0 %v106
    %238 = vmatpush.msra.mxu0 %v105
    %239 = vmatpush.msra.mxu0 %v104
    %240 = vmatpush.msra.mxu0 %v103
    %241 = vmatpush.msra.mxu0 %v102
    %242 = vmatpush.msra.mxu0 %v101
    %243 = vmatpush.msra.mxu0 %v100
    %244 = vmatpush.msra.mxu0 %v99
    %245 = vmatpush.msra.mxu0 %v98
    %246 = vmatpush.msra.mxu0 %v97
    %247 = vmatpush.msra.mxu0 %v96
    %248 = vmatmul.f32.gmra.mxu0 %v144
    %v249 = vpop.f32.mrf.mxu0
    %v250 = vadd.f32 %v230, %v249
    %251 = vdwg.mxu0
    %252 = vmatpush.msra.mxu0 %v127
    %253 = vmatpush.msra.mxu0 %v126
    %254 = vmatpush.msra.mxu0 %v125
    %255 = vmatpush.msra.mxu0 %v124
    %256 = vmatpush.msra.mxu0 %v123
    %257 = vmatpush.msra.mxu0 %v122
    %258 = vmatpush.msra.mxu0 %v121
    %259 = vmatpush.msra.mxu0 %v120
    %260 = vmatpush.msra.mxu0 %v119
    %261 = vmatpush.msra.mxu0 %v118
    %262 = vmatpush.msra.mxu0 %v117
    %263 = vmatpush.msra.mxu0 %v116
    %264 = vmatpush.msra.mxu0 %v115
    %265 = vmatpush.msra.mxu0 %v114
    %266 = vmatpush.msra.mxu0 %v113
    %267 = vmatpush.msra.mxu0 %v112
    %268 = vmatmul.f32.gmra.mxu0 %v145
    %v269 = vpop.f32.mrf.mxu0
    %v270 = vadd.f32 %v250, %v269
    %271 = vdwg.mxu0
    %v272 = vmax.f32 %v270, 0.0
    %v273 = vld [vmem:[%s3] sm:$0xff]
    %v274 = vld [vmem:[%s3 + $0x8] sm:$0xff]
    %v275 = vld [vmem:[%s3 + $0x10] sm:$0xff]
    %v276 = vld [vmem:[%s3 + $0x18] sm:$0xff]
    %v277 = vld [vmem:[%s3 + $0x20] sm:$0xff]
    %v278 = vld [vmem:[%s3 + $0x28] sm:$0xff]
    %v279 = vld [vmem:[%s3 + $0x30] sm:$0xff]
    %v280 = vld [vmem:[%s3 + $0x38] sm:$0xff]
    %v281 = vld [vmem:[%s3 + $0x40] sm:$0xff]
    %v282 = vld [vmem:[%s3 + $0x48] sm:$0xff]
    %v283 = vld [vmem:[%s3 + $0x50] sm:$0xff]
    %v284 = vld [vmem:[%s3 + $0x58] sm:$0xff]
    %v285 = vld [vmem:[%s3 + $0x60] sm:$0xff]
    %v286 = vld [vmem:[%s3 + $0x68] sm:$0xff]
    %v287 = vld [vmem:[%s3 + $0x70] sm:$0xff]
    %v288 = vld [vmem:[%s3 + $0x78] sm:$0xff]
    %v289 = vld [vmem:[%s3 + $0x80] sm:$0xff]
    %v290 = vld [vmem:[%s3 + $0x88] sm:$0xff]
    %v291 = vld [vmem:[%s3 + $0x90] sm:$0xff]
    %v292 = vld [vmem:[%s3 + $0x98] sm:$0xff]
    %v293 = vld [vmem:[%s3 + $0xa0] sm:$0xff]
    %v294 = vld [vmem:[%s3 + $0xa8] sm:$0xff]
    %v295 = vld [vmem:[%s3 + $0xb0] sm:$0xff]
    %v296 = vld [vmem:[%s3 + $0xb8] sm:$0xff]
    %v297 = vld [vmem:[%s3 + $0xc0] sm:$0xff]
    %v298 = vld [vmem:[%s3 + $0xc8] sm:$0xff]
    %v299 = vld [vmem:[%s3 + $0xd0] sm:$0xff]
    %v300 = vld [vmem:[%s3 + $0xd8] sm:$0xff]
    %v301 = vld [vmem:[%s3 + $0xe0] sm:$0xff]
    %v302 = vld [vmem:[%s3 + $0xe8] sm:$0xff]
    %v303 = vld [vmem:[%s3 + $0xf0] sm:$0xff]
    %v304 = vld [vmem:[%s3 + $0xf8] sm:$0xff]
    %v305 = vld [vmem:[%s3 + $0x100] sm:$0xff]
    %v306 = vld [vmem:[%s3 + $0x108] sm:$0xff]
    %v307 = vld [vmem:[%s3 + $0x110] sm:$0xff]
    %v308 = vld [vmem:[%s3 + $0x118] sm:$0xff]
    %v309 = vld [vmem:[%s3 + $0x120] sm:$0xff]
    %v310 = vld [vmem:[%s3 + $0x128] sm:$0xff]
    %v311 = vld [vmem:[%s3 + $0x130] sm:$0xff]
    %v312 = vld [vmem:[%s3 + $0x138] sm:$0xff]
    %v313 = vld [vmem:[%s3 + $0x140] sm:$0xff]
    %v314 = vld [vmem:[%s3 + $0x148] sm:$0xff]
    %v315 = vld [vmem:[%s3 + $0x150] sm:$0xff]
    %v316 = vld [vmem:[%s3 + $0x158] sm:$0xff]
    %v317 = vld [vmem:[%s3 + $0x160] sm:$0xff]
    %v318 = vld [vmem:[%s3 + $0x168] sm:$0xff]
    %v319 = vld [vmem:[%s3 + $0x170] sm:$0xff]
    %v320 = vld [vmem:[%s3 + $0x178] sm:$0xff]
    %v321 = vld [vmem:[%s4] sm:$0x3f]
    %v323 = vperm.slane %v321, 0
    %v324 = vperm.slane %v321, 1
    %v325 = vperm.slane %v321, 2
    %v326 = vperm.slane %v321, 3
    %v327 = vperm.slane %v321, 4
    %v328 = vperm.slane %v321, 5
    %vm335 = vcmask 523264
    %v337 = vsel %vm335, %v272, 0
    %339 = vmatpush.msra.mxu0 0.0
    %340 = vmatpush.msra.mxu0 0.0
    %341 = vmatpush.msra.mxu0 0.0
    %342 = vmatpush.msra.mxu0 0.0
    %343 = vmatpush.msra.mxu0 0.0
    %344 = vmatpush.msra.mxu0 0.0
    %345 = vmatpush.msra.mxu0 0.0
    %346 = vmatpush.msra.mxu0 0.0
    %347 = vmatpush.msra.mxu0 %v315
    %348 = vmatpush.msra.mxu0 %v309
    %349 = vmatpush.msra.mxu0 %v303
    %350 = vmatpush.msra.mxu0 %v297
    %351 = vmatpush.msra.mxu0 %v291
    %352 = vmatpush.msra.mxu0 %v285
    %353 = vmatpush.msra.mxu0 %v279
    %354 = vmatpush.msra.mxu0 %v273
    %355 = vmatmul.f32.gmra.mxu0 %v337
    %v356 = vpop.f32.mrf.mxu0
    %v357 = vadd.f32 %v323, %v356
    %358 = vdwg.mxu0
    %359 = vmatpush.msra.mxu0 0.0
    %360 = vmatpush.msra.mxu0 0.0
    %361 = vmatpush.msra.mxu0 0.0
    %362 = vmatpush.msra.mxu0 0.0
    %363 = vmatpush.msra.mxu0 0.0
    %364 = vmatpush.msra.mxu0 0.0
    %365 = vmatpush.msra.mxu0 0.0
    %366 = vmatpush.msra.mxu0 0.0
    %367 = vmatpush.msra.mxu0 %v316
    %368 = vmatpush.msra.mxu0 %v310
    %369 = vmatpush.msra.mxu0 %v304
    %370 = vmatpush.msra.mxu0 %v298
    %371 = vmatpush.msra.mxu0 %v292
    %372 = vmatpush.msra.mxu0 %v286
    %373 = vmatpush.msra.mxu0 %v280
    %374 = vmatpush.msra.mxu0 %v274
    %375 = vmatmul.f32.gmra.mxu0 %v337
    %v376 = vpop.f32.mrf.mxu0
    %v377 = vadd.f32 %v324, %v376
    %378 = vdwg.mxu0
    %379 = vmatpush.msra.mxu0 0.0
    %380 = vmatpush.msra.mxu0 0.0
    %381 = vmatpush.msra.mxu0 0.0
    %382 = vmatpush.msra.mxu0 0.0
    %383 = vmatpush.msra.mxu0 0.0
    %384 = vmatpush.msra.mxu0 0.0
    %385 = vmatpush.msra.mxu0 0.0
    %386 = vmatpush.msra.mxu0 0.0
    %387 = vmatpush.msra.mxu0 %v317
    %388 = vmatpush.msra.mxu0 %v311
    %389 = vmatpush.msra.mxu0 %v305
    %390 = vmatpush.msra.mxu0 %v299
    %391 = vmatpush.msra.mxu0 %v293
    %392 = vmatpush.msra.mxu0 %v287
    %393 = vmatpush.msra.mxu0 %v281
    %394 = vmatpush.msra.mxu0 %v275
    %395 = vmatmul.f32.gmra.mxu0 %v337
    %v396 = vpop.f32.mrf.mxu0
    %v397 = vadd.f32 %v325, %v396
    %398 = vdwg.mxu0
    %399 = vmatpush.msra.mxu0 0.0
    %400 = vmatpush.msra.mxu0 0.0
    %401 = vmatpush.msra.mxu0 0.0
    %402 = vmatpush.msra.mxu0 0.0
    %403 = vmatpush.msra.mxu0 0.0
    %404 = vmatpush.msra.mxu0 0.0
    %405 = vmatpush.msra.mxu0 0.0
    %406 = vmatpush.msra.mxu0 0.0
    %407 = vmatpush.msra.mxu0 %v318
    %408 = vmatpush.msra.mxu0 %v312
    %409 = vmatpush.msra.mxu0 %v306
    %410 = vmatpush.msra.mxu0 %v300
    %411 = vmatpush.msra.mxu0 %v294
    %412 = vmatpush.msra.mxu0 %v288
    %413 = vmatpush.msra.mxu0 %v282
    %414 = vmatpush.msra.mxu0 %v276
    %415 = vmatmul.f32.gmra.mxu0 %v337
    %v416 = vpop.f32.mrf.mxu0
    %v417 = vadd.f32 %v326, %v416
    %418 = vdwg.mxu0
    %419 = vmatpush.msra.mxu0 0.0
    %420 = vmatpush.msra.mxu0 0.0
    %421 = vmatpush.msra.mxu0 0.0
    %422 = vmatpush.msra.mxu0 0.0
    %423 = vmatpush.msra.mxu0 0.0
    %424 = vmatpush.msra.mxu0 0.0
    %425 = vmatpush.msra.mxu0 0.0
    %426 = vmatpush.msra.mxu0 0.0
    %427 = vmatpush.msra.mxu0 %v319
    %428 = vmatpush.msra.mxu0 %v313
    %429 = vmatpush.msra.mxu0 %v307
    %430 = vmatpush.msra.mxu0 %v301
    %431 = vmatpush.msra.mxu0 %v295
    %432 = vmatpush.msra.mxu0 %v289
    %433 = vmatpush.msra.mxu0 %v283
    %434 = vmatpush.msra.mxu0 %v277
    %435 = vmatmul.f32.gmra.mxu0 %v337
    %v436 = vpop.f32.mrf.mxu0
    %v437 = vadd.f32 %v327, %v436
    %438 = vdwg.mxu0
    %439 = vmatpush.msra.mxu0 0.0
    %440 = vmatpush.msra.mxu0 0.0
    %441 = vmatpush.msra.mxu0 0.0
    %442 = vmatpush.msra.mxu0 0.0
    %443 = vmatpush.msra.mxu0 0.0
    %444 = vmatpush.msra.mxu0 0.0
    %445 = vmatpush.msra.mxu0 0.0
    %446 = vmatpush.msra.mxu0 0.0
    %447 = vmatpush.msra.mxu0 %v320
    %448 = vmatpush.msra.mxu0 %v314
    %449 = vmatpush.msra.mxu0 %v308
    %450 = vmatpush.msra.mxu0 %v302
    %451 = vmatpush.msra.mxu0 %v296
    %452 = vmatpush.msra.mxu0 %v290
    %453 = vmatpush.msra.mxu0 %v284
    %454 = vmatpush.msra.mxu0 %v278
    %455 = vmatmul.f32.gmra.mxu0 %v337
    %v456 = vpop.f32.mrf.mxu0
    %v457 = vadd.f32 %v328, %v456
    %458 = vdwg.mxu0
    %v459 = vld [vmem:[%s5] sm:$0xff]
    %v460 = vld [vmem:[%s5 + $0x8] sm:$0xff]
    %v461 = vld [vmem:[%s5 + $0x10] sm:$0xff]
    %v462 = vld [vmem:[%s5 + $0x18] sm:$0xff]
    %v463 = vld [vmem:[%s5 + $0x20] sm:$0xff]
    %v464 = vld [vmem:[%s5 + $0x28] sm:$0xff]
    %v465 = vld [vmem:[%s5 + $0x30] sm:$0xff]
    %v466 = vld [vmem:[%s5 + $0x38] sm:$0xff]
    %v467 = vld [vmem:[%s5 + $0x40] sm:$0xff]
    %v468 = vld [vmem:[%s5 + $0x48] sm:$0xff]
    %v469 = vld [vmem:[%s5 + $0x50] sm:$0xff]
    %v470 = vld [vmem:[%s5 + $0x58] sm:$0xff]
    %v471 = vld [vmem:[%s5 + $0x60] sm:$0xff]
    %v472 = vld [vmem:[%s5 + $0x68] sm:$0xff]
    %v473 = vld [vmem:[%s5 + $0x70] sm:$0xff]
    %v474 = vld [vmem:[%s5 + $0x78] sm:$0xff]
    %v475 = vld [vmem:[%s5 + $0x80] sm:$0xff]
    %v476 = vld [vmem:[%s5 + $0x88] sm:$0xff]
    %v477 = vld [vmem:[%s5 + $0x90] sm:$0xff]
    %v478 = vld [vmem:[%s5 + $0x98] sm:$0xff]
    %v479 = vld [vmem:[%s5 + $0xa0] sm:$0xff]
    %v480 = vld [vmem:[%s5 + $0xa8] sm:$0xff]
    %v481 = vld [vmem:[%s5 + $0xb0] sm:$0xff]
    %v482 = vld [vmem:[%s5 + $0xb8] sm:$0xff]
    %v483 = vmul.f32 %v357, %v357
    %v484 = vmul.f32 %v377, %v377
    %v485 = vmul.f32 %v397, %v397
    %v486 = vmul.f32 %v417, %v417
    %v487 = vmul.f32 %v437, %v437
    %v488 = vmul.f32 %v457, %v457
    %vm489 = vcmask 1043456
    %v490 = vsel %vm489, %v483, 0.0
    %v491 = vsel %vm489, %v484, 0.0
    %v492 = vadd.f32 %v490, %v491
    %v493 = vsel %vm489, %v485, 0.0
    %v494 = vadd.f32 %v492, %v493
    %v495 = vsel %vm489, %v486, 0.0
    %v496 = vadd.f32 %v494, %v495
    %v497 = vsel %vm489, %v487, 0.0
    %v498 = vadd.f32 %v496, %v497
    %v499 = vsel %vm489, %v488, 0.0
    %v500 = vadd.f32 %v498, %v499
    %501 = vadd.xlane.f32.xlu0 %v500
    %v502 = vpop.xlane.xlu0 %501
    %v503 = vrsqrt.pop %v502
    %v504 = vmul.f32 %v503, %v502
    %v505 = vmul.f32 %v504, %v503
    %v506 = vmul.f32 0.5, %v505
    %v507 = vsub.f32 1.5, %v506
    %v508 = vmul.f32 %v503, %v507
    %v509 = vmul.f32 %v502, %v508
    %vm510 = vcmp.eq.f32.partialorder %v502, inf
    %v511 = vsel %vm510, %v502, %v509
    %vm512 = vcmp.eq.f32.partialorder %v502, 0.0
    %v513 = vand.u32 %v502, 2147483648
    %v514 = vsel %vm512, %v513, %v511
    %v515 = vmax.f32 %v514, 1e-12
    %v516 = vrcp.pop %v515
    %v517 = vmul.f32 %v515, %v516
    %v518 = vsub.f32 1.0, %v517
    %v519 = vmul.f32 %v516, %v518
    %v520 = vadd.f32 %v516, %v519
    %vm521 = vweird.f32 %v515
    %vm522 = vweird.f32 %v516
    %vm523 = vmor %vm521, %vm522
    %v524 = vsel %vm523, %v516, %v520
    %v525 = vand.u32 2147483647, %v515
    %vm526 = vcmp.eq.f32.partialorder %v525, 8.507059e+37
    %v527 = vand.u32 %v515, 2147483648
    %v528 = vor.u32 1.1754944e-38, %v527
    %v529 = vsel %vm526, %v528, %v524
    %v530 = vmul.f32 %v357, %v529
    %v531 = vmul.f32 %v377, %v529
    %v532 = vmul.f32 %v397, %v529
    %v533 = vmul.f32 %v417, %v529
    %v534 = vmul.f32 %v437, %v529
    %v535 = vmul.f32 %v457, %v529
    %v536 = vmul.f32 %v459, %v459
    %v537 = vmul.f32 %v460, %v460
    %v538 = vmul.f32 %v461, %v461
    %v539 = vmul.f32 %v462, %v462
    %v540 = vmul.f32 %v463, %v463
    %v541 = vmul.f32 %v464, %v464
    %v542 = vmul.f32 %v465, %v465
    %v543 = vmul.f32 %v466, %v466
    %v544 = vmul.f32 %v467, %v467
    %v545 = vmul.f32 %v468, %v468
    %v546 = vmul.f32 %v469, %v469
    %v547 = vmul.f32 %v470, %v470
    %v548 = vmul.f32 %v471, %v471
    %v549 = vmul.f32 %v472, %v472
    %v550 = vmul.f32 %v473, %v473
    %v551 = vmul.f32 %v474, %v474
    %v552 = vmul.f32 %v475, %v475
    %v553 = vmul.f32 %v476, %v476
    %v554 = vmul.f32 %v477, %v477
    %v555 = vmul.f32 %v478, %v478
    %v556 = vmul.f32 %v479, %v479
    %v557 = vmul.f32 %v480, %v480
    %v558 = vmul.f32 %v481, %v481
    %v559 = vmul.f32 %v482, %v482
    %v560 = vadd.f32 %v536, %v537
    %v561 = vadd.f32 %v560, %v538
    %v562 = vadd.f32 %v561, %v539
    %v563 = vadd.f32 %v562, %v540
    %v564 = vadd.f32 %v563, %v541
    %565 = vadd.xlane.f32.xlu0 %v564
    %v566 = vpop.xlane.xlu0 %565
    %v567 = vadd.f32 %v542, %v543
    %v568 = vadd.f32 %v567, %v544
    %v569 = vadd.f32 %v568, %v545
    %v570 = vadd.f32 %v569, %v546
    %v571 = vadd.f32 %v570, %v547
    %572 = vadd.xlane.f32.xlu0 %v571
    %v573 = vpop.xlane.xlu0 %572
    %v574 = vadd.f32 %v548, %v549
    %v575 = vadd.f32 %v574, %v550
    %v576 = vadd.f32 %v575, %v551
    %v577 = vadd.f32 %v576, %v552
    %v578 = vadd.f32 %v577, %v553
    %579 = vadd.xlane.f32.xlu0 %v578
    %v580 = vpop.xlane.xlu0 %579
    %v581 = vadd.f32 %v554, %v555
    %v582 = vadd.f32 %v581, %v556
    %v583 = vadd.f32 %v582, %v557
    %v584 = vadd.f32 %v583, %v558
    %v585 = vadd.f32 %v584, %v559
    %586 = vadd.xlane.f32.xlu0 %v585
    %v587 = vpop.xlane.xlu0 %586
    %v588 = vrsqrt.pop %v566
    %v589 = vmul.f32 %v588, %v566
    %v590 = vmul.f32 %v589, %v588
    %v591 = vmul.f32 0.5, %v590
    %v592 = vsub.f32 1.5, %v591
    %v593 = vmul.f32 %v588, %v592
    %v594 = vmul.f32 %v566, %v593
    %vm595 = vcmp.eq.f32.partialorder %v566, inf
    %v596 = vsel %vm595, %v566, %v594
    %vm597 = vcmp.eq.f32.partialorder %v566, 0.0
    %v598 = vand.u32 %v566, 2147483648
    %v599 = vsel %vm597, %v598, %v596
    %v600 = vrsqrt.pop %v573
    %v601 = vmul.f32 %v600, %v573
    %v602 = vmul.f32 %v601, %v600
    %v603 = vmul.f32 0.5, %v602
    %v604 = vsub.f32 1.5, %v603
    %v605 = vmul.f32 %v600, %v604
    %v606 = vmul.f32 %v573, %v605
    %vm607 = vcmp.eq.f32.partialorder %v573, inf
    %v608 = vsel %vm607, %v573, %v606
    %vm609 = vcmp.eq.f32.partialorder %v573, 0.0
    %v610 = vand.u32 %v573, 2147483648
    %v611 = vsel %vm609, %v610, %v608
    %v612 = vrsqrt.pop %v580
    %v613 = vmul.f32 %v612, %v580
    %v614 = vmul.f32 %v613, %v612
    %v615 = vmul.f32 0.5, %v614
    %v616 = vsub.f32 1.5, %v615
    %v617 = vmul.f32 %v612, %v616
    %v618 = vmul.f32 %v580, %v617
    %vm619 = vcmp.eq.f32.partialorder %v580, inf
    %v620 = vsel %vm619, %v580, %v618
    %vm621 = vcmp.eq.f32.partialorder %v580, 0.0
    %v622 = vand.u32 %v580, 2147483648
    %v623 = vsel %vm621, %v622, %v620
    %v624 = vrsqrt.pop %v587
    %v625 = vmul.f32 %v624, %v587
    %v626 = vmul.f32 %v625, %v624
    %v627 = vmul.f32 0.5, %v626
    %v628 = vsub.f32 1.5, %v627
    %v629 = vmul.f32 %v624, %v628
    %v630 = vmul.f32 %v587, %v629
    %vm631 = vcmp.eq.f32.partialorder %v587, inf
    %v632 = vsel %vm631, %v587, %v630
    %vm633 = vcmp.eq.f32.partialorder %v587, 0.0
    %v634 = vand.u32 %v587, 2147483648
    %v635 = vsel %vm633, %v634, %v632
    %v636 = vmax.f32 %v599, 1e-12
    %v637 = vmax.f32 %v611, 1e-12
    %v638 = vmax.f32 %v623, 1e-12
    %v639 = vmax.f32 %v635, 1e-12
    %v640 = vrcp.pop %v636
    %v641 = vmul.f32 %v636, %v640
    %v642 = vsub.f32 1.0, %v641
    %v643 = vmul.f32 %v640, %v642
    %v644 = vadd.f32 %v640, %v643
    %vm645 = vweird.f32 %v636
    %vm646 = vweird.f32 %v640
    %vm647 = vmor %vm645, %vm646
    %v648 = vsel %vm647, %v640, %v644
    %v649 = vand.u32 2147483647, %v636
    %vm650 = vcmp.eq.f32.partialorder %v649, 8.507059e+37
    %v651 = vand.u32 %v636, 2147483648
    %v652 = vor.u32 1.1754944e-38, %v651
    %v653 = vsel %vm650, %v652, %v648
    %v654 = vmul.f32 %v459, %v653
    %v655 = vmul.f32 %v460, %v653
    %v656 = vmul.f32 %v461, %v653
    %v657 = vmul.f32 %v462, %v653
    %v658 = vmul.f32 %v463, %v653
    %v659 = vmul.f32 %v464, %v653
    %v660 = vrcp.pop %v637
    %v661 = vmul.f32 %v637, %v660
    %v662 = vsub.f32 1.0, %v661
    %v663 = vmul.f32 %v660, %v662
    %v664 = vadd.f32 %v660, %v663
    %vm665 = vweird.f32 %v637
    %vm666 = vweird.f32 %v660
    %vm667 = vmor %vm665, %vm666
    %v668 = vsel %vm667, %v660, %v664
    %v669 = vand.u32 2147483647, %v637
    %vm670 = vcmp.eq.f32.partialorder %v669, 8.507059e+37
    %v671 = vand.u32 %v637, 2147483648
    %v672 = vor.u32 1.1754944e-38, %v671
    %v673 = vsel %vm670, %v672, %v668
    %v674 = vmul.f32 %v465, %v673
    %v675 = vmul.f32 %v466, %v673
    %v676 = vmul.f32 %v467, %v673
    %v677 = vmul.f32 %v468, %v673
    %v678 = vmul.f32 %v469, %v673
    %v679 = vmul.f32 %v470, %v673
    %v680 = vrcp.pop %v638
    %v681 = vmul.f32 %v638, %v680
    %v682 = vsub.f32 1.0, %v681
    %v683 = vmul.f32 %v680, %v682
    %v684 = vadd.f32 %v680, %v683
    %vm685 = vweird.f32 %v638
    %vm686 = vweird.f32 %v680
    %vm687 = vmor %vm685, %vm686
    %v688 = vsel %vm687, %v680, %v684
    %v689 = vand.u32 2147483647, %v638
    %vm690 = vcmp.eq.f32.partialorder %v689, 8.507059e+37
    %v691 = vand.u32 %v638, 2147483648
    %v692 = vor.u32 1.1754944e-38, %v691
    %v693 = vsel %vm690, %v692, %v688
    %v694 = vmul.f32 %v471, %v693
    %v695 = vmul.f32 %v472, %v693
    %v696 = vmul.f32 %v473, %v693
    %v697 = vmul.f32 %v474, %v693
    %v698 = vmul.f32 %v475, %v693
    %v699 = vmul.f32 %v476, %v693
    %v700 = vrcp.pop %v639
    %v701 = vmul.f32 %v639, %v700
    %v702 = vsub.f32 1.0, %v701
    %v703 = vmul.f32 %v700, %v702
    %v704 = vadd.f32 %v700, %v703
    %vm705 = vweird.f32 %v639
    %vm706 = vweird.f32 %v700
    %vm707 = vmor %vm705, %vm706
    %v708 = vsel %vm707, %v700, %v704
    %v709 = vand.u32 2147483647, %v639
    %vm710 = vcmp.eq.f32.partialorder %v709, 8.507059e+37
    %v711 = vand.u32 %v639, 2147483648
    %v712 = vor.u32 1.1754944e-38, %v711
    %v713 = vsel %vm710, %v712, %v708
    %v714 = vmul.f32 %v477, %v713
    %v715 = vmul.f32 %v478, %v713
    %v716 = vmul.f32 %v479, %v713
    %v717 = vmul.f32 %v480, %v713
    %v718 = vmul.f32 %v481, %v713
    %v719 = vmul.f32 %v482, %v713
    %v726 = vrot.slane %v531, 7
    %v727 = vrot.slane %v532, 6
    %v728 = vrot.slane %v533, 5
    %v729 = vrot.slane %v534, 4
    %v730 = vrot.slane %v535, 3
    %vm731 = vcmask 1040384
    %v732 = vsel %vm731, %v530, %v726
    %vm733 = vcmask 1041408
    %v734 = vsel %vm733, %v732, %v727
    %vm735 = vcmask 1043459
    %v736 = vsel %vm735, %v728, %v729
    %vm737 = vcmask 1044483
    %v738 = vsel %vm737, %v736, %v730
    %vm739 = vcmask 1042432
    %v740 = vsel %vm739, %v734, %v738
    %vm741 = vcmask 1041409
    %v742 = vsel %vm741, %v530, %v726
    %vm743 = vcmask 1042433
    %v744 = vsel %vm743, %v742, %v727
    %vm745 = vcmask 1044484
    %v746 = vsel %vm745, %v728, %v729
    %vm747 = vcmask 1045508
    %v748 = vsel %vm747, %v746, %v730
    %vm749 = vcmask 1043457
    %v750 = vsel %vm749, %v744, %v748
    %v751 = vrot.slane %v750, 1
    %vm752 = vcmask 1042434
    %v753 = vsel %vm752, %v530, %v726
    %vm754 = vcmask 1043458
    %v755 = vsel %vm754, %v753, %v727
    %vm756 = vcmask 1045509
    %v757 = vsel %vm756, %v728, %v729
    %vm758 = vcmask 1046533
    %v759 = vsel %vm758, %v757, %v730
    %vm760 = vcmask 1044482
    %v761 = vsel %vm760, %v755, %v759
    %v762 = vrot.slane %v761, 2
    %v763 = vsel %vm735, %v530, %v726
    %v764 = vsel %vm737, %v763, %v727
    %vm765 = vcmask 1046534
    %v766 = vsel %vm765, %v728, %v729
    %vm767 = vcmask 1045504
    %v768 = vsel %vm767, %v730, %v766
    %vm769 = vcmask 1045507
    %v770 = vsel %vm769, %v764, %v768
    %v771 = vrot.slane %v770, 3
    %v772 = vperm.slane %v740, 0
    %v773 = vperm.slane %v740, 1
    %v774 = vperm.slane %v740, 2
    %v775 = vperm.slane %v740, 3
    %v776 = vperm.slane %v740, 4
    %v777 = vperm.slane %v740, 5
    %v778 = vperm.slane %v751, 0
    %v779 = vperm.slane %v751, 1
    %v780 = vperm.slane %v751, 2
    %v781 = vperm.slane %v751, 3
    %v782 = vperm.slane %v751, 4
    %v783 = vperm.slane %v751, 5
    %v784 = vperm.slane %v762, 0
    %v785 = vperm.slane %v762, 1
    %v786 = vperm.slane %v762, 2
    %v787 = vperm.slane %v762, 3
    %v788 = vperm.slane %v762, 4
    %v789 = vperm.slane %v762, 5
    %v790 = vperm.slane %v771, 0
    %v791 = vperm.slane %v771, 1
    %v792 = vperm.slane %v771, 2
    %v793 = vperm.slane %v771, 3
    %v794 = vperm.slane %v771, 4
    %v795 = vperm.slane %v771, 5
    %v820 = vmul.f32 %v654, %v772
    %v821 = vmul.f32 %v655, %v773
    %v822 = vmul.f32 %v656, %v774
    %v823 = vmul.f32 %v657, %v775
    %v824 = vmul.f32 %v658, %v776
    %v825 = vmul.f32 %v659, %v777
    %v826 = vmul.f32 %v674, %v778
    %v827 = vmul.f32 %v675, %v779
    %v828 = vmul.f32 %v676, %v780
    %v829 = vmul.f32 %v677, %v781
    %v830 = vmul.f32 %v678, %v782
    %v831 = vmul.f32 %v679, %v783
    %v832 = vmul.f32 %v694, %v784
    %v833 = vmul.f32 %v695, %v785
    %v834 = vmul.f32 %v696, %v786
    %v835 = vmul.f32 %v697, %v787
    %v836 = vmul.f32 %v698, %v788
    %v837 = vmul.f32 %v699, %v789
    %v838 = vmul.f32 %v714, %v790
    %v839 = vmul.f32 %v715, %v791
    %v840 = vmul.f32 %v716, %v792
    %v841 = vmul.f32 %v717, %v793
    %v842 = vmul.f32 %v718, %v794
    %v843 = vmul.f32 %v719, %v795
    %v844 = vadd.f32 %v820, %v821
    %v845 = vadd.f32 %v844, %v822
    %v846 = vadd.f32 %v845, %v823
    %v847 = vadd.f32 %v846, %v824
    %v848 = vadd.f32 %v847, %v825
    %849 = vadd.xlane.f32.xlu0 %v848
    %v850 = vpop.xlane.xlu0 %849
    %v851 = vadd.f32 %v826, %v827
    %v852 = vadd.f32 %v851, %v828
    %v853 = vadd.f32 %v852, %v829
    %v854 = vadd.f32 %v853, %v830
    %v855 = vadd.f32 %v854, %v831
    %856 = vadd.xlane.f32.xlu0 %v855
    %v857 = vpop.xlane.xlu0 %856
    %v858 = vadd.f32 %v832, %v833
    %v859 = vadd.f32 %v858, %v834
    %v860 = vadd.f32 %v859, %v835
    %v861 = vadd.f32 %v860, %v836
    %v862 = vadd.f32 %v861, %v837
    %863 = vadd.xlane.f32.xlu0 %v862
    %v864 = vpop.xlane.xlu0 %863
    %v865 = vadd.f32 %v838, %v839
    %v866 = vadd.f32 %v865, %v840
    %v867 = vadd.f32 %v866, %v841
    %v868 = vadd.f32 %v867, %v842
    %v869 = vadd.f32 %v868, %v843
    %870 = vadd.xlane.f32.xlu0 %v869
    %v871 = vpop.xlane.xlu0 %870
    %v872 = vlaneseq
    %v873 = vand.u32 %v872, 127
    %v878 = vperm.slane %v850, %v873
    %v879 = vperm.slane %v857, %v873
    %v880 = vperm.slane %v864, %v873
    %v881 = vperm.slane %v871, %v873
    %v882 = vsel %vm741, %v879, %v878
    %v883 = vsel %vm752, %v880, %v882
    %v884 = vsel %vm735, %v881, %v883
    %vm886 = vcmask 60416
    %v887 = vsel %vm886, %v884, -inf
    %888 = vmax.xlane.f32.xlu0 %v887
    %v889 = vpop.xlane.xlu0 %888
    %v891 = vperm.slane %v889, 0
    %v892 = vperm.slane %v889, 1
    %v893 = vperm.slane %v889, 2
    %v894 = vperm.slane %v889, 3
    %vm899 = vcmp.ge.f32.partialorder %v850, %v891
    %vm900 = vcmp.ge.f32.partialorder %v857, %v892
    %vm901 = vcmp.ge.f32.partialorder %v864, %v893
    %vm902 = vcmp.ge.f32.partialorder %v871, %v894
    %v903 = vlaneseq
    %v904 = vshrl.u32 %v903, 7
    %906 = vset.pattern.permute.xlu0 %v904
    %907 = vperm.xlu0 %906, %v873
    %v908 = vpop.permute.xlu0 %907
    %v909 = vsel %vm899, %v908, 8
    %v910 = vsel %vm900, %v908, 8
    %v911 = vsel %vm901, %v908, 8
    %v912 = vsel %vm902, %v908, 8
    %913 = vset.pattern.permute.xlu0 0
    %914 = vperm.xlu0 %913, %v909
    %v915 = vpop.permute.xlu0 %914
    %916 = vset.pattern.permute.xlu0 0
    %917 = vperm.xlu0 %916, %v910
    %v918 = vpop.permute.xlu0 %917
    %919 = vset.pattern.permute.xlu0 0
    %920 = vperm.xlu0 %919, %v911
    %v921 = vpop.permute.xlu0 %920
    %922 = vset.pattern.permute.xlu0 0
    %923 = vperm.xlu0 %922, %v912
    %v924 = vpop.permute.xlu0 %923
    %v925 = vperm.slane %v915, %v873
    %v926 = vperm.slane %v918, %v873
    %v927 = vperm.slane %v921, %v873
    %v928 = vperm.slane %v924, %v873
    %v929 = vsel %vm741, %v926, %v925
    %v930 = vsel %vm752, %v927, %v929
    %v931 = vsel %vm735, %v928, %v930
    %v932 = vsel %vm886, %v931, 2147483647
    %v933 = vand.u32 %v932, 65535
    %v934 = vshra.s32 %v932, 16
    %v935 = vcvt.s32.f32 %v933
    %v936 = vcvt.s32.f32 %v934
    %937 = vmin.xlane.f32.xlu0 %v936
    %v938 = vpop.xlane.xlu0 %937
    %vm939 = vcmp.eq.f32.partialorder %v936, %v938
    %v940 = vsel %vm939, %v935, inf
    %941 = vmin.xlane.f32.xlu0 %v940
    %v942 = vpop.xlane.xlu0 %941
    %v943 = vcvt.f32.s32 %v942
    %v944 = vcvt.f32.s32 %v938
    %v945 = vshll.u32 %v944, 16
    %v946 = vadd.s32 %v945, %v943
    %vm947 = vcmask 3072
    %948 = vst.msk [vmem:[%s7] sm:$0xf] %vm947, %v946
    %vm949 = vcmp.eq.s32.totalorder %v873, %v946
    %v950 = vsel %vm949, 1, 0
    %v951 = vcvt.s32.f32 %v950
    %v952 = vperm.slane %v951, 0
    %v953 = vlaneseq
    %v954 = vshrl.u32 %v953, 7
    %956 = vset.pattern.permute.xlu0 %v954
    %957 = vperm.xlu0 %956, %v952
    %v958 = vpop.permute.xlu0 %957
    %v959 = vperm.slane %v951, 1
    %v960 = vlaneseq
    %v961 = vshrl.u32 %v960, 7
    %963 = vset.pattern.permute.xlu0 %v961
    %964 = vperm.xlu0 %963, %v959
    %v965 = vpop.permute.xlu0 %964
    %v966 = vperm.slane %v951, 2
    %v967 = vlaneseq
    %v968 = vshrl.u32 %v967, 7
    %970 = vset.pattern.permute.xlu0 %v968
    %971 = vperm.xlu0 %970, %v966
    %v972 = vpop.permute.xlu0 %971
    %v973 = vperm.slane %v951, 3
    %v974 = vlaneseq
    %v975 = vshrl.u32 %v974, 7
    %977 = vset.pattern.permute.xlu0 %v975
    %978 = vperm.xlu0 %977, %v973
    %v979 = vpop.permute.xlu0 %978
    %v980 = vmul.f32 %v459, %v958
    %v981 = vmul.f32 %v460, %v958
    %v982 = vmul.f32 %v461, %v958
    %v983 = vmul.f32 %v462, %v958
    %v984 = vmul.f32 %v463, %v958
    %v985 = vmul.f32 %v464, %v958
    %v986 = vmul.f32 %v465, %v965
    %v987 = vmul.f32 %v466, %v965
    %v988 = vmul.f32 %v467, %v965
    %v989 = vmul.f32 %v468, %v965
    %v990 = vmul.f32 %v469, %v965
    %v991 = vmul.f32 %v470, %v965
    %v992 = vmul.f32 %v471, %v972
    %v993 = vmul.f32 %v472, %v972
    %v994 = vmul.f32 %v473, %v972
    %v995 = vmul.f32 %v474, %v972
    %v996 = vmul.f32 %v475, %v972
    %v997 = vmul.f32 %v476, %v972
    %v998 = vmul.f32 %v477, %v979
    %v999 = vmul.f32 %v478, %v979
    %v1000 = vmul.f32 %v479, %v979
    %v1001 = vmul.f32 %v480, %v979
    %v1002 = vmul.f32 %v481, %v979
    %v1003 = vmul.f32 %v482, %v979
    %v1004 = vrot.slane %v980, 4
    %v1005 = vadd.f32 %v980, %v1004
    %v1006 = vrot.slane %v1005, 2
    %v1007 = vadd.f32 %v1005, %v1006
    %v1008 = vrot.slane %v1007, 1
    %v1009 = vadd.f32 %v1007, %v1008
    %v1010 = vrot.slane %v981, 4
    %v1011 = vadd.f32 %v981, %v1010
    %v1012 = vrot.slane %v1011, 2
    %v1013 = vadd.f32 %v1011, %v1012
    %v1014 = vrot.slane %v1013, 1
    %v1015 = vadd.f32 %v1013, %v1014
    %v1016 = vrot.slane %v982, 4
    %v1017 = vadd.f32 %v982, %v1016
    %v1018 = vrot.slane %v1017, 2
    %v1019 = vadd.f32 %v1017, %v1018
    %v1020 = vrot.slane %v1019, 1
    %v1021 = vadd.f32 %v1019, %v1020
    %v1022 = vrot.slane %v983, 4
    %v1023 = vadd.f32 %v983, %v1022
    %v1024 = vrot.slane %v1023, 2
    %v1025 = vadd.f32 %v1023, %v1024
    %v1026 = vrot.slane %v1025, 1
    %v1027 = vadd.f32 %v1025, %v1026
    %v1028 = vrot.slane %v984, 4
    %v1029 = vadd.f32 %v984, %v1028
    %v1030 = vrot.slane %v1029, 2
    %v1031 = vadd.f32 %v1029, %v1030
    %v1032 = vrot.slane %v1031, 1
    %v1033 = vadd.f32 %v1031, %v1032
    %v1034 = vrot.slane %v985, 4
    %v1035 = vadd.f32 %v985, %v1034
    %v1036 = vrot.slane %v1035, 2
    %v1037 = vadd.f32 %v1035, %v1036
    %v1038 = vrot.slane %v1037, 1
    %v1039 = vadd.f32 %v1037, %v1038
    %v1040 = vrot.slane %v986, 4
    %v1041 = vadd.f32 %v986, %v1040
    %v1042 = vrot.slane %v1041, 2
    %v1043 = vadd.f32 %v1041, %v1042
    %v1044 = vrot.slane %v1043, 1
    %v1045 = vadd.f32 %v1043, %v1044
    %v1046 = vrot.slane %v987, 4
    %v1047 = vadd.f32 %v987, %v1046
    %v1048 = vrot.slane %v1047, 2
    %v1049 = vadd.f32 %v1047, %v1048
    %v1050 = vrot.slane %v1049, 1
    %v1051 = vadd.f32 %v1049, %v1050
    %v1052 = vrot.slane %v988, 4
    %v1053 = vadd.f32 %v988, %v1052
    %v1054 = vrot.slane %v1053, 2
    %v1055 = vadd.f32 %v1053, %v1054
    %v1056 = vrot.slane %v1055, 1
    %v1057 = vadd.f32 %v1055, %v1056
    %v1058 = vrot.slane %v989, 4
    %v1059 = vadd.f32 %v989, %v1058
    %v1060 = vrot.slane %v1059, 2
    %v1061 = vadd.f32 %v1059, %v1060
    %v1062 = vrot.slane %v1061, 1
    %v1063 = vadd.f32 %v1061, %v1062
    %v1064 = vrot.slane %v990, 4
    %v1065 = vadd.f32 %v990, %v1064
    %v1066 = vrot.slane %v1065, 2
    %v1067 = vadd.f32 %v1065, %v1066
    %v1068 = vrot.slane %v1067, 1
    %v1069 = vadd.f32 %v1067, %v1068
    %v1070 = vrot.slane %v991, 4
    %v1071 = vadd.f32 %v991, %v1070
    %v1072 = vrot.slane %v1071, 2
    %v1073 = vadd.f32 %v1071, %v1072
    %v1074 = vrot.slane %v1073, 1
    %v1075 = vadd.f32 %v1073, %v1074
    %v1076 = vrot.slane %v992, 4
    %v1077 = vadd.f32 %v992, %v1076
    %v1078 = vrot.slane %v1077, 2
    %v1079 = vadd.f32 %v1077, %v1078
    %v1080 = vrot.slane %v1079, 1
    %v1081 = vadd.f32 %v1079, %v1080
    %v1082 = vrot.slane %v993, 4
    %v1083 = vadd.f32 %v993, %v1082
    %v1084 = vrot.slane %v1083, 2
    %v1085 = vadd.f32 %v1083, %v1084
    %v1086 = vrot.slane %v1085, 1
    %v1087 = vadd.f32 %v1085, %v1086
    %v1088 = vrot.slane %v994, 4
    %v1089 = vadd.f32 %v994, %v1088
    %v1090 = vrot.slane %v1089, 2
    %v1091 = vadd.f32 %v1089, %v1090
    %v1092 = vrot.slane %v1091, 1
    %v1093 = vadd.f32 %v1091, %v1092
    %v1094 = vrot.slane %v995, 4
    %v1095 = vadd.f32 %v995, %v1094
    %v1096 = vrot.slane %v1095, 2
    %v1097 = vadd.f32 %v1095, %v1096
    %v1098 = vrot.slane %v1097, 1
    %v1099 = vadd.f32 %v1097, %v1098
    %v1100 = vrot.slane %v996, 4
    %v1101 = vadd.f32 %v996, %v1100
    %v1102 = vrot.slane %v1101, 2
    %v1103 = vadd.f32 %v1101, %v1102
    %v1104 = vrot.slane %v1103, 1
    %v1105 = vadd.f32 %v1103, %v1104
    %v1106 = vrot.slane %v997, 4
    %v1107 = vadd.f32 %v997, %v1106
    %v1108 = vrot.slane %v1107, 2
    %v1109 = vadd.f32 %v1107, %v1108
    %v1110 = vrot.slane %v1109, 1
    %v1111 = vadd.f32 %v1109, %v1110
    %v1112 = vrot.slane %v998, 4
    %v1113 = vadd.f32 %v998, %v1112
    %v1114 = vrot.slane %v1113, 2
    %v1115 = vadd.f32 %v1113, %v1114
    %v1116 = vrot.slane %v1115, 1
    %v1117 = vadd.f32 %v1115, %v1116
    %v1118 = vrot.slane %v999, 4
    %v1119 = vadd.f32 %v999, %v1118
    %v1120 = vrot.slane %v1119, 2
    %v1121 = vadd.f32 %v1119, %v1120
    %v1122 = vrot.slane %v1121, 1
    %v1123 = vadd.f32 %v1121, %v1122
    %v1124 = vrot.slane %v1000, 4
    %v1125 = vadd.f32 %v1000, %v1124
    %v1126 = vrot.slane %v1125, 2
    %v1127 = vadd.f32 %v1125, %v1126
    %v1128 = vrot.slane %v1127, 1
    %v1129 = vadd.f32 %v1127, %v1128
    %v1130 = vrot.slane %v1001, 4
    %v1131 = vadd.f32 %v1001, %v1130
    %v1132 = vrot.slane %v1131, 2
    %v1133 = vadd.f32 %v1131, %v1132
    %v1134 = vrot.slane %v1133, 1
    %v1135 = vadd.f32 %v1133, %v1134
    %v1136 = vrot.slane %v1002, 4
    %v1137 = vadd.f32 %v1002, %v1136
    %v1138 = vrot.slane %v1137, 2
    %v1139 = vadd.f32 %v1137, %v1138
    %v1140 = vrot.slane %v1139, 1
    %v1141 = vadd.f32 %v1139, %v1140
    %v1142 = vrot.slane %v1003, 4
    %v1143 = vadd.f32 %v1003, %v1142
    %v1144 = vrot.slane %v1143, 2
    %v1145 = vadd.f32 %v1143, %v1144
    %v1146 = vrot.slane %v1145, 1
    %v1147 = vadd.f32 %v1145, %v1146
    %v1148 = vld [vmem:[%s6] sm:$0x3f]
    %v1149 = vmul.f32 %v1009, %v1009
    %v1150 = vmul.f32 %v1015, %v1015
    %v1151 = vmul.f32 %v1021, %v1021
    %v1152 = vmul.f32 %v1027, %v1027
    %v1153 = vmul.f32 %v1033, %v1033
    %v1154 = vmul.f32 %v1039, %v1039
    %v1155 = vmul.f32 %v1045, %v1045
    %v1156 = vmul.f32 %v1051, %v1051
    %v1157 = vmul.f32 %v1057, %v1057
    %v1158 = vmul.f32 %v1063, %v1063
    %v1159 = vmul.f32 %v1069, %v1069
    %v1160 = vmul.f32 %v1075, %v1075
    %v1161 = vmul.f32 %v1081, %v1081
    %v1162 = vmul.f32 %v1087, %v1087
    %v1163 = vmul.f32 %v1093, %v1093
    %v1164 = vmul.f32 %v1099, %v1099
    %v1165 = vmul.f32 %v1105, %v1105
    %v1166 = vmul.f32 %v1111, %v1111
    %v1167 = vmul.f32 %v1117, %v1117
    %v1168 = vmul.f32 %v1123, %v1123
    %v1169 = vmul.f32 %v1129, %v1129
    %v1170 = vmul.f32 %v1135, %v1135
    %v1171 = vmul.f32 %v1141, %v1141
    %v1172 = vmul.f32 %v1147, %v1147
    %v1197 = vsel %vm741, %v1155, %v1149
    %v1198 = vsel %vm752, %v1161, %v1197
    %v1199 = vsel %vm735, %v1167, %v1198
    %v1200 = vsel %vm741, %v1156, %v1150
    %v1201 = vsel %vm752, %v1162, %v1200
    %v1202 = vsel %vm735, %v1168, %v1201
    %v1203 = vsel %vm741, %v1157, %v1151
    %v1204 = vsel %vm752, %v1163, %v1203
    %v1205 = vsel %vm735, %v1169, %v1204
    %v1206 = vsel %vm741, %v1158, %v1152
    %v1207 = vsel %vm752, %v1164, %v1206
    %v1208 = vsel %vm735, %v1170, %v1207
    %v1209 = vsel %vm741, %v1159, %v1153
    %v1210 = vsel %vm752, %v1165, %v1209
    %v1211 = vsel %vm735, %v1171, %v1210
    %v1212 = vsel %vm741, %v1160, %v1154
    %v1213 = vsel %vm752, %v1166, %v1212
    %v1214 = vsel %vm735, %v1172, %v1213
    %v1221 = vsel %vm489, %v1199, 0.0
    %v1222 = vsel %vm489, %v1202, 0.0
    %v1223 = vadd.f32 %v1221, %v1222
    %v1224 = vsel %vm489, %v1205, 0.0
    %v1225 = vadd.f32 %v1223, %v1224
    %v1226 = vsel %vm489, %v1208, 0.0
    %v1227 = vadd.f32 %v1225, %v1226
    %v1228 = vsel %vm489, %v1211, 0.0
    %v1229 = vadd.f32 %v1227, %v1228
    %v1230 = vsel %vm489, %v1214, 0.0
    %v1231 = vadd.f32 %v1229, %v1230
    %1232 = vadd.xlane.f32.xlu0 %v1231
    %v1233 = vpop.xlane.xlu0 %1232
    %v1234 = vrsqrt.pop %v1233
    %v1235 = vmul.f32 %v1234, %v1233
    %v1236 = vmul.f32 %v1235, %v1234
    %v1237 = vmul.f32 0.5, %v1236
    %v1238 = vsub.f32 1.5, %v1237
    %v1239 = vmul.f32 %v1234, %v1238
    %v1240 = vmul.f32 %v1233, %v1239
    %vm1241 = vcmp.eq.f32.partialorder %v1233, inf
    %v1242 = vsel %vm1241, %v1233, %v1240
    %vm1243 = vcmp.eq.f32.partialorder %v1233, 0.0
    %v1244 = vand.u32 %v1233, 2147483648
    %v1245 = vsel %vm1243, %v1244, %v1242
    %v1246 = vmax.f32 %v1245, 1e-06
    %v1247 = vmul.f32 %v1148, %v1148
    %v1249 = vperm.slane %v1247, 0
    %v1250 = vperm.slane %v1247, 1
    %v1251 = vperm.slane %v1247, 2
    %v1252 = vperm.slane %v1247, 3
    %v1253 = vperm.slane %v1247, 4
    %v1254 = vperm.slane %v1247, 5
    %v1261 = vsel %vm731, %v1249, 0.0
    %v1262 = vsel %vm731, %v1250, 0.0
    %v1263 = vadd.f32 %v1261, %v1262
    %v1264 = vsel %vm731, %v1251, 0.0
    %v1265 = vadd.f32 %v1263, %v1264
    %v1266 = vsel %vm731, %v1252, 0.0
    %v1267 = vadd.f32 %v1265, %v1266
    %v1268 = vsel %vm731, %v1253, 0.0
    %v1269 = vadd.f32 %v1267, %v1268
    %v1270 = vsel %vm731, %v1254, 0.0
    %v1271 = vadd.f32 %v1269, %v1270
    %1272 = vadd.xlane.f32.xlu0 %v1271
    %v1273 = vpop.xlane.xlu0 %1272
    %v1274 = vrsqrt.pop %v1273
    %v1275 = vmul.f32 %v1274, %v1273
    %v1276 = vmul.f32 %v1275, %v1274
    %v1277 = vmul.f32 0.5, %v1276
    %v1278 = vsub.f32 1.5, %v1277
    %v1279 = vmul.f32 %v1274, %v1278
    %v1280 = vmul.f32 %v1273, %v1279
    %vm1281 = vcmp.eq.f32.partialorder %v1273, inf
    %v1282 = vsel %vm1281, %v1273, %v1280
    %vm1283 = vcmp.eq.f32.partialorder %v1273, 0.0
    %v1284 = vand.u32 %v1273, 2147483648
    %v1285 = vsel %vm1283, %v1284, %v1282
    %v1286 = vmax.f32 %v1285, 1e-06
    %v1288 = vperm.slane %v1148, 0
    %v1289 = vperm.slane %v1148, 1
    %v1290 = vperm.slane %v1148, 2
    %v1291 = vperm.slane %v1148, 3
    %v1292 = vperm.slane %v1148, 4
    %v1293 = vperm.slane %v1148, 5
    %v1300 = vmul.f32 %v1009, %v1288
    %v1301 = vmul.f32 %v1015, %v1289
    %v1302 = vmul.f32 %v1021, %v1290
    %v1303 = vmul.f32 %v1027, %v1291
    %v1304 = vmul.f32 %v1033, %v1292
    %v1305 = vmul.f32 %v1039, %v1293
    %v1306 = vmul.f32 %v1045, %v1288
    %v1307 = vmul.f32 %v1051, %v1289
    %v1308 = vmul.f32 %v1057, %v1290
    %v1309 = vmul.f32 %v1063, %v1291
    %v1310 = vmul.f32 %v1069, %v1292
    %v1311 = vmul.f32 %v1075, %v1293
    %v1312 = vmul.f32 %v1081, %v1288
    %v1313 = vmul.f32 %v1087, %v1289
    %v1314 = vmul.f32 %v1093, %v1290
    %v1315 = vmul.f32 %v1099, %v1291
    %v1316 = vmul.f32 %v1105, %v1292
    %v1317 = vmul.f32 %v1111, %v1293
    %v1318 = vmul.f32 %v1117, %v1288
    %v1319 = vmul.f32 %v1123, %v1289
    %v1320 = vmul.f32 %v1129, %v1290
    %v1321 = vmul.f32 %v1135, %v1291
    %v1322 = vmul.f32 %v1141, %v1292
    %v1323 = vmul.f32 %v1147, %v1293
    %v1348 = vrot.slane %v1306, 7
    %v1349 = vsel %vm741, %v1348, %v1300
    %v1350 = vrot.slane %v1312, 6
    %v1351 = vsel %vm752, %v1350, %v1349
    %v1352 = vrot.slane %v1318, 5
    %v1353 = vsel %vm735, %v1352, %v1351
    %v1354 = vrot.slane %v1307, 7
    %v1355 = vsel %vm741, %v1354, %v1301
    %v1356 = vrot.slane %v1313, 6
    %v1357 = vsel %vm752, %v1356, %v1355
    %v1358 = vrot.slane %v1319, 5
    %v1359 = vsel %vm735, %v1358, %v1357
    %v1360 = vrot.slane %v1308, 7
    %v1361 = vsel %vm741, %v1360, %v1302
    %v1362 = vrot.slane %v1314, 6
    %v1363 = vsel %vm752, %v1362, %v1361
    %v1364 = vrot.slane %v1320, 5
    %v1365 = vsel %vm735, %v1364, %v1363
    %v1366 = vrot.slane %v1309, 7
    %v1367 = vsel %vm741, %v1366, %v1303
    %v1368 = vrot.slane %v1315, 6
    %v1369 = vsel %vm752, %v1368, %v1367
    %v1370 = vrot.slane %v1321, 5
    %v1371 = vsel %vm735, %v1370, %v1369
    %v1372 = vrot.slane %v1310, 7
    %v1373 = vsel %vm741, %v1372, %v1304
    %v1374 = vrot.slane %v1316, 6
    %v1375 = vsel %vm752, %v1374, %v1373
    %v1376 = vrot.slane %v1322, 5
    %v1377 = vsel %vm735, %v1376, %v1375
    %v1378 = vrot.slane %v1311, 7
    %v1379 = vsel %vm741, %v1378, %v1305
    %v1380 = vrot.slane %v1317, 6
    %v1381 = vsel %vm752, %v1380, %v1379
    %v1382 = vrot.slane %v1323, 5
    %v1383 = vsel %vm735, %v1382, %v1381
    %v1390 = vsel %vm489, %v1353, 0.0
    %v1391 = vsel %vm489, %v1359, 0.0
    %v1392 = vadd.f32 %v1390, %v1391
    %v1393 = vsel %vm489, %v1365, 0.0
    %v1394 = vadd.f32 %v1392, %v1393
    %v1395 = vsel %vm489, %v1371, 0.0
    %v1396 = vadd.f32 %v1394, %v1395
    %v1397 = vsel %vm489, %v1377, 0.0
    %v1398 = vadd.f32 %v1396, %v1397
    %v1399 = vsel %vm489, %v1383, 0.0
    %v1400 = vadd.f32 %v1398, %v1399
    %1401 = vadd.xlane.f32.xlu0 %v1400
    %v1402 = vpop.xlane.xlu0 %1401
    %v1403 = vperm.slane %v1286, 0
    %v1404 = vmul.f32 %v1246, %v1403
    %v1405 = vrcp.pop %v1404
    %v1406 = vmul.f32 %v1404, %v1405
    %v1407 = vsub.f32 1.0, %v1406
    %v1408 = vmul.f32 %v1405, %v1407
    %v1409 = vadd.f32 %v1405, %v1408
    %vm1410 = vweird.f32 %v1404
    %vm1411 = vweird.f32 %v1405
    %vm1412 = vmor %vm1410, %vm1411
    %v1413 = vsel %vm1412, %v1405, %v1409
    %v1414 = vand.u32 2147483647, %v1404
    %vm1415 = vcmp.eq.f32.partialorder %v1414, 8.507059e+37
    %v1416 = vand.u32 %v1404, 2147483648
    %v1417 = vor.u32 1.1754944e-38, %v1416
    %v1418 = vsel %vm1415, %v1417, %v1413
    %v1419 = vmul.f32 %v1402, %v1418
    %v1420 = vsel %vm489, %v1419, 0.0
    %v1421 = vrot.slane %v1420, 4
    %v1422 = vadd.f32 %v1420, %v1421
    %v1423 = vrot.slane %v1422, 2
    %v1424 = vadd.f32 %v1422, %v1423
    %v1425 = vrot.slane %v1424, 1
    %v1426 = vadd.f32 %v1424, %v1425
    %v1427 = vrcp.pop 4.0
    %v1428 = vmul.f32 4.0, %v1427
    %v1429 = vsub.f32 1.0, %v1428
    %v1430 = vmul.f32 %v1427, %v1429
    %v1431 = vadd.f32 %v1427, %v1430
    %vm1432 = vweird.f32 %v1427
    %v1433 = vsel %vm1432, %v1427, %v1431
    %v1434 = vmul.f32 %v1426, %v1433
    %v1435 = vsub.f32 1.0, %v1434
    %vm1436 = vcmask 0
    %1437 = vst.msk [vmem:[#allocation2] sm:$0x1] %vm1436, %v1435
    // Predicated region
    $region30: #{tpu_custom_call.1} parent=1 // pred_check
      _
    $region31: #{tpu_custom_call.1} parent=1 // pred_check_branch
      %1439 = sbr.rel (0) target = $region33
    $region32: #{tpu_custom_call.1} parent=1 // pred_region
      _
    $region33: #{tpu_custom_call.1} parent=1 // pred_fallthru
      _
    // Predicated region
    $region34: #{tpu_custom_call.1} parent=1 // pred_check
      _
    $region35: #{tpu_custom_call.1} parent=1 // pred_check_branch
      %1441 = sbr.rel (0) target = $region37
    $region36: #{tpu_custom_call.1} parent=1 // pred_region
      %1443 = vsyncadd [#allocation3], 0
      %s1445 = sshll.u32 [#allocation2], 4
      %s1446 = int_to_ptr.vmem [resolvable:$true] %s1445
      %s1447 = sshll.u32 %s8, 4
      %s1448 = int_to_ptr.hbm [resolvable:$true] %s1447
      %1450 = dma.vmem_to_hbm [thread:$0]  %s1446, 16, %s1448, [#allocation3]
    $region37: #{tpu_custom_call.1} parent=1 // pred_fallthru
      _
    // Predicated region
    $region38: #{tpu_custom_call.1} parent=1 // pred_check
      _
    $region39: #{tpu_custom_call.1} parent=1 // pred_check_branch
      %1452 = sbr.rel (0) target = $region41
    $region40: #{tpu_custom_call.1} parent=1 // pred_region
      _
    $region41: #{tpu_custom_call.1} parent=1 // pred_fallthru
      _
    // Predicated region
    $region42: #{tpu_custom_call.1} parent=1 // pred_check
      _
    $region43: #{tpu_custom_call.1} parent=1 // pred_check_branch
      %1454 = sbr.rel (0) target = $region45
    $region44: #{tpu_custom_call.1} parent=1 // pred_region
      %1456 = dma.done [#allocation3], 16
    $region45: #{tpu_custom_call.1} parent=1 // pred_fallthru
      _
    %1457 = vsyncpa [#allocation3], 1

</llo_original>
